<compile_context>
chip_gen: v6e
topology: v6e:2x2x1
jax: 0.10.0
libtpu: 0.0.40
codegen_flags: <defaults>
</compile_context>

<pallas_src>
from functools import partial

import numpy as np
import jax
import jax.numpy as jnp
from jax.experimental import pallas as pl
from jax.experimental.pallas import tpu as pltpu


# ----------------------------------------------------------------------------
# Host-side symbol tables (deterministic, mirrors OneHotEncoder.__init__)
# ----------------------------------------------------------------------------
_PROTEIN_AAS = "ARNDCQEGHILKMFPSTWYV"


def _build_lut(molecule: str):
    """256-entry byte LUT -> id, output dim, and (uniform_id, uniform_val)."""
    assert molecule in ("rna", "protein")
    lut = np.full(256, -1, dtype=np.int32)
    if molecule == "rna":
        # id == output channel for A/U/T/G/C; id 4 is the 'N' uniform row.
        for ch, i in (("A", 0), ("U", 1), ("T", 1), ("G", 2), ("C", 3), ("N", 4)):
            lut[ord(ch)] = i
        return lut, 4, (4, 0.25)
    for i, aa in enumerate(_PROTEIN_AAS):
        lut[ord(aa)] = i
    return lut, 20, None


def _round_up(x: int, m: int) -> int:
    return ((x + m - 1) // m) * m


# ----------------------------------------------------------------------------
# Pallas kernel: one lane-tile of the sequence -> transposed encoding block
#   ids_ref : (1, T)   int32   (sequence positions on lanes)
#   out_ref : (D, T)   float32 (channels on sublanes, positions on lanes)
# ----------------------------------------------------------------------------
def _encode_kernel(ids_ref, out_ref, *, uniform_id, uniform_val):
    d, t = out_ref.shape
    ids = jnp.broadcast_to(ids_ref[...], (d, t))              # sublane broadcast
    ch = jax.lax.broadcasted_iota(jnp.int32, (d, t), 0)       # channel index
    onehot = (ids == ch).astype(jnp.float32)                  # pure VPU compare
    if uniform_id is None:
        out_ref[...] = onehot
    else:
        # 'N' row: 0.25 in every channel.
        out_ref[...] = jnp.where(ids == uniform_id,
                                 jnp.float32(uniform_val), onehot)


def one_hot_encode(ids: jnp.ndarray, dim: int, *, uniform=None, tile_seq: int = 2048):
    """ids: (S,) int32 symbol ids. Returns (S, dim) float32 encodings."""
    s = int(ids.shape[0])

    # Lane tile: multiple of 128, as large as possible (default 2048), but
    # capped so sequences covering >=2 lane tiles keep >=2 grid steps
    # (v7x has 2 TensorCores; v5e/v6e are unaffected).
    tile = min(tile_seq, _round_up(s, 128))
    if _round_up(s, 128) // 128 >= 2:
        tile = min(tile, _round_up(-(-s // 2), 128))
    s_pad = _round_up(s, tile)

    # Pad with id 0 (a valid symbol); padded columns are sliced off below.
    ids2 = jnp.pad(ids, (0, s_pad - s)).reshape(1, s_pad).astype(jnp.int32)

    if uniform is None:
        kernel = partial(_encode_kernel, uniform_id=None, uniform_val=0.0)
    else:
        kernel = partial(_encode_kernel, uniform_id=int(uniform[0]),
                         uniform_val=float(uniform[1]))

    out_t = pl.pallas_call(
        kernel,
        out_shape=jax.ShapeDtypeStruct((dim, s_pad), jnp.float32),
        grid_spec=pltpu.PrefetchScalarGridSpec(
            num_scalar_prefetch=0,
            grid=(s_pad // tile,),
            in_specs=[pl.BlockSpec((1, tile), lambda i: (0, i))],
            out_specs=pl.BlockSpec((dim, tile), lambda i: (0, i)),
        ),
        compiler_params=pltpu.CompilerParams(
            dimension_semantics=("parallel",),
        ),
    )(ids2)

    # Layout plumbing back to the PyTorch-facing (S, dim) shape.
    return out_t.T[:s]


# ----------------------------------------------------------------------------
# Wrapper mimicking OneHotEncoder.forward (string in, (len, dim) array out)
# ----------------------------------------------------------------------------
class OneHotEncoderPallas:
    def __init__(self, molecule: str):
        assert molecule in ("rna", "protein"), (
            "molecule arg must either be 'protein' or 'rna'"
        )
        self.type = molecule
        self._lut, self.dim, self._uniform = _build_lut(molecule)

    def __call__(self, x: str):
        codes = np.frombuffer(x.encode("ascii"), dtype=np.uint8)
        ids = self._lut[codes]
        if np.any(ids < 0):
            bad = x[int(np.argmax(ids < 0))]
            raise KeyError(bad)  # same failure semantics as the dict lookup
        return one_hot_encode(jnp.asarray(ids, dtype=jnp.int32), self.dim,
                              uniform=self._uniform)


# ----------------------------------------------------------------------------
# Reference (pure numpy, same dict semantics as the PyTorch module)
# ----------------------------------------------------------------------------
_RNA_DICT = {
    "A": [1, 0, 0, 0], "U": [0, 1, 0, 0], "T": [0, 1, 0, 0],
    "G": [0, 0, 1, 0], "C": [0, 0, 0, 1], "N": [0.25] * 4,
}
_PROT_DICT = {aa: np.eye(20, dtype=np.float32)[i] for i, aa in enumerate(_PROTEIN_AAS)}


def _reference(molecule: str, seq: str) -> np.ndarray:
    d = _RNA_DICT if molecule == "rna" else _PROT_DICT
    return np.stack([np.asarray(d[c], dtype=np.float32) for c in seq])


if __name__ == "__main__":
    key = jax.random.PRNGKey(0)
    k_rna, k_prot, k_long = jax.random.split(key, 3)

    # --- RNA, short sequence (len 16) --------------------------------------
    rna_letters = np.array(list("AUTGCN"))
    idx = np.asarray(jax.random.randint(k_rna, (16,), 0, len(rna_letters)))
    rna_seq = "".join(rna_letters[idx])
    enc_rna = OneHotEncoderPallas("rna")
    out_rna = jax.block_until_ready(enc_rna(rna_seq))
    assert out_rna.shape == (16, 4), out_rna.shape
    np.testing.assert_allclose(np.asarray(out_rna), _reference("rna", rna_seq),
                               rtol=0, atol=0)

    # --- Protein, short sequence (len 8) -----------------------------------
    prot_letters = np.array(list(_PROTEIN_AAS))
    idx_p = np.asarray(jax.random.randint(k_prot, (8,), 0, 20))
    prot_seq = "".join(prot_letters[idx_p])
    enc_prot = OneHotEncoderPallas("protein")
    out_prot = jax.block_until_ready(enc_prot(prot_seq))
    assert out_prot.shape == (8, 20), out_prot.shape
    np.testing.assert_allclose(np.asarray(out_prot),
                               _reference("protein", prot_seq), rtol=0, atol=0)

    # --- RNA, longer sequence (len 300): exercises multi-tile grid (>=2
    #     parallel steps) and the non-multiple-of-tile padding/slice path. ---
    idx_l = np.asarray(jax.random.randint(k_long, (300,), 0, len(rna_letters)))
    long_seq = "".join(rna_letters[idx_l])
    out_long = jax.block_until_ready(enc_rna(long_seq))
    assert out_long.shape == (300, 4), out_long.shape
    np.testing.assert_allclose(np.asarray(out_long),
                               _reference("rna", long_seq), rtol=0, atol=0)

    # TODO(synk): PyTorch's torch.tensor(...) may yield float64 for the protein
    # dict (numpy rows); the kernel emits float32 with identical values.
    print("KERNEL_OK")
</pallas_src>

<mosaic_0001>
module attributes {stable_mosaic.version = 11 : i64} {
  func.func @_encode_kernel(%arg0: i32, %arg1: memref<1x128xi32, #tpu.memory_space<vmem>>, %arg2: memref<4x128xf32, #tpu.memory_space<vmem>>) attributes {dimension_semantics = [#tpu.dimension_semantics<parallel>], iteration_bounds = array<i64: 1>, scalar_prefetch = 0 : i64, scratch_operands = 0 : i64, tpu.core_type = #tpu.core_type<tc>, window_params = [{transform_indices = @transform_0, window_bounds = array<i64: 1, 128>}, {transform_indices = @transform_1, window_bounds = array<i64: 4, 128>}]} {
    %c0 = arith.constant 0 : index
    %c0_0 = arith.constant 0 : index
    %0 = vector.load %arg1[%c0, %c0_0] : memref<1x128xi32, #tpu.memory_space<vmem>>, vector<1x128xi32>
    %1 = vector.shape_cast %0 : vector<1x128xi32> to vector<1x128xi32>
    %2 = vector.broadcast %1 : vector<1x128xi32> to vector<4x128xi32>
    %3 = tpu.iota {dimensions = array<i32: 0>} : vector<4x128xi32>
    %4 = arith.cmpi eq, %2, %3 : vector<4x128xi32>
    %5 = arith.extui %4 : vector<4x128xi1> to vector<4x128xi32>
    %6 = arith.sitofp %5 : vector<4x128xi32> to vector<4x128xf32>
    %c4_i32 = arith.constant 4 : i32
    %7 = vector.broadcast %c4_i32 : i32 to vector<4x128xi32>
    %8 = arith.cmpi eq, %2, %7 : vector<4x128xi32>
    %cst = arith.constant 2.500000e-01 : f32
    %9 = vector.broadcast %cst : f32 to vector<4x128xf32>
    %10 = arith.select %8, %9, %6 : vector<4x128xi1>, vector<4x128xf32>
    %c0_1 = arith.constant 0 : index
    %c0_2 = arith.constant 0 : index
    %11 = vector.load %arg2[%c0_1, %c0_2] : memref<4x128xf32, #tpu.memory_space<vmem>>, vector<4x128xf32>
    tpu.vector_store %arg2[%c0_1, %c0_2], %10 {strides = array<i32>} : memref<4x128xf32, #tpu.memory_space<vmem>>, vector<4x128xf32>,
    return
  }
  func.func @transform_0(%arg0: i32) -> (i32, i32) {
    %c0_i32 = arith.constant 0 : i32
    %c0_i32_0 = arith.constant 0 : i32
    return %c0_i32, %arg0 : i32, i32
  }
  func.func @transform_1(%arg0: i32) -> (i32, i32) {
    %c0_i32 = arith.constant 0 : i32
    %c0_i32_0 = arith.constant 0 : i32
    return %c0_i32, %arg0 : i32, i32
  }
}

</mosaic_0001>

<llo_original>
// kernel: tpu_custom_call.1
$region0: #{tpu_custom_call.1}
  #allocation0 [shape = 'u32[]', space=smem, size = 0x4, offset = 0x4, fixed_abs, tag = 'smem constant byte address 0x4 - core index']
  #allocation1 [shape = 'u32[144,128]{1,0:T(1,128)}', space=vmem, size = 0x12000, scoped, tag = 'internal scratch']
  %s0 = inlined_call_operand.hbm [shape: s32[1,128], index: 0, kind: input, shape index: {}]
  %s1 = inlined_call_operand.hbm [shape: f32[4,128], index: 1, kind: output, shape index: {}]
  %s2 = sld [smem:[#allocation0]]
  $region18: #{tpu_custom_call.1} parent=0
    _
  %s4 = ssub.s32 1, %s2
  %s5 = scalar_select 0, %s4, %s2
  $region1: #{tpu_custom_call.1} parent=0
    #allocation2 [shape = 'u8[512]{0}', space=vmem, size = 0x400, scoped, tag = 'input window, operand 0, single buffered']
    #allocation3 [shape = 's32[1]{0}', space=sflag, size = 0x4, scoped, tag = 'scoped memory for tpu_custom_call.1']
    #allocation4 [shape = 's32[1]{0}', space=sflag, size = 0x4, scoped, tag = 'scoped memory for tpu_custom_call.1']
    #allocation5 [shape = 'u8[2048]{0}', space=vmem, size = 0x800, scoped, tag = 'output window, operand 0, single buffered']
    %6 = vsyncpa [#allocation3], 0
    %7 = vsyncpa [#allocation4], 0
    // Predicated region
    $region2: #{tpu_custom_call.1} parent=1 // pred_check
      _
    $region3: #{tpu_custom_call.1} parent=1 // pred_check_branch
      %9 = sbr.rel (0) target = $region5
    $region4: #{tpu_custom_call.1} parent=1 // pred_region
      %s11 = ssub.s32 16, 16
      %12 = vsyncadd [#allocation3], %s11
      %s14 = sshll.u32 [#allocation2], 4
      %s15 = int_to_ptr.vmem [resolvable:$true] %s14
      %17 = dma.hbm_to_vmem [thread:$0]  %s0, 16, %s15, [#allocation3]
    $region5: #{tpu_custom_call.1} parent=1 // pred_fallthru
      _
    // Predicated region
    $region6: #{tpu_custom_call.1} parent=1 // pred_check
      _
    $region7: #{tpu_custom_call.1} parent=1 // pred_check_branch
      %19 = sbr.rel (0) target = $region9
    $region8: #{tpu_custom_call.1} parent=1 // pred_region
      %20 = dma.done [#allocation3], 16
    $region9: #{tpu_custom_call.1} parent=1 // pred_fallthru
      _
    %v21 = vld [vmem:[#allocation2] sm:$0x1]
    %v22 = vlaneseq
    %v23 = vshrl.u32 %v22, 7
    %v24 = vsub.s32 0, %v23
    %v25 = vrot.slane %v21, %v24
    %v26 = vlaneseq
    %v27 = vshrl.u32 %v26, 7
    %vm28 = vcmp.eq.s32.totalorder %v25, %v27
    %v29 = vsel %vm28, 1, 0
    %v30 = vcvt.s32.f32 %v29
    %vm31 = vcmp.eq.s32.totalorder %v25, 4
    %v32 = vsel %vm31, 0.25, %v30
    %33 = vst [vmem:[#allocation5] sm:$0xf] %v32
    // Predicated region
    $region10: #{tpu_custom_call.1} parent=1 // pred_check
      _
    $region11: #{tpu_custom_call.1} parent=1 // pred_check_branch
      %35 = sbr.rel (0) target = $region13
    $region12: #{tpu_custom_call.1} parent=1 // pred_region
      %s37 = ssub.s32 64, 64
      %38 = vsyncadd [#allocation4], %s37
      %s40 = sshll.u32 [#allocation5], 4
      %s41 = int_to_ptr.vmem [resolvable:$true] %s40
      %43 = dma.vmem_to_hbm [thread:$0]  %s41, 64, %s1, [#allocation4]
    $region13: #{tpu_custom_call.1} parent=1 // pred_fallthru
      _
    // Predicated region
    $region14: #{tpu_custom_call.1} parent=1 // pred_check
      _
    $region15: #{tpu_custom_call.1} parent=1 // pred_check_branch
      %45 = sbr.rel (0) target = $region17
    $region16: #{tpu_custom_call.1} parent=1 // pred_region
      %46 = dma.done [#allocation4], 64
    $region17: #{tpu_custom_call.1} parent=1 // pred_fallthru
      _
    %47 = vsyncpa [#allocation3], 1
    %48 = vsyncpa [#allocation4], 1

</llo_original>
